<compile_context>
chip_gen: v7x
topology: tpu7x:2x2x1
jax: 0.10.0
libtpu: 0.0.40
codegen_flags: <defaults>
</compile_context>

<pallas_src>
import functools

import jax
import jax.numpy as jnp
import numpy as np
from jax.experimental import pallas as pl
from jax.experimental.pallas import tpu as pltpu


def _dice_partial_kernel(probs_ref, tgt_ref, inter_ref, acc_ref, *, n_groups):
    """One (batch b, outer o, inner spatial tile j) grid step.

    probs_ref: (1, C, TILE)    native dtype (cast to f32 in-kernel)
    tgt_ref:   (1, 1, TILE)    int8/int32; ignore_index AND ragged-tail padding
                               are pre-mapped to -1 in the wrapper, so the full
                               mask is just `t == class_row`.
    inter_ref: (1, 1, 1, 1) f32 per-(b, o) partial intersection
    acc_ref:   (G, TILE) f32   running accumulator (classes folded to <=8 rows)
    """
    j = pl.program_id(2)

    @pl.when(j == 0)
    def _():
        acc_ref[...] = jnp.zeros_like(acc_ref)

    p = probs_ref[0].astype(jnp.float32)          # (C, TILE)  in-kernel cast
    t = tgt_ref[0].astype(jnp.int32)              # (1, TILE)  tiny upcast

    c_dim, tile_len = p.shape
    row_class = jax.lax.broadcasted_iota(jnp.int32, (c_dim, tile_len), 0)
    mask = t == row_class
    # INVARIANT: this must stay a select (jnp.where), never `mask * p`.  The
    # out-of-bounds lanes of the ragged last probs block hold garbage (possibly
    # NaN/Inf); their target lanes are -1 so the select discards them, but a
    # multiply would propagate NaN into the running sum.
    contrib = jnp.where(mask, p, 0.0)

    if n_groups > 1:
        # Fold vreg-aligned groups of 8 class rows together (VPU adds) so the
        # accumulator read-modify-write touches at most 8 sublanes per lane.
        g = c_dim // n_groups
        contrib = contrib.reshape(n_groups, g, tile_len).sum(axis=0)

    acc_ref[...] += contrib                       # pure VPU adds in the hot loop

    @pl.when(j == pl.num_programs(2) - 1)
    def _():
        # Single cross-lane (XLU) reduction per (b, o) sequence, epilogue only.
        inter_ref[0, 0] = jnp.sum(acc_ref[...], keepdims=True)   # (1, 1)


def multiclass_dice_loss(logits, targets, num_classes, smooth=1e-06, ignore_index=0):
    """Pallas implementation of MulticlassDiceLoss.forward.

    logits:  [B, C, H, W] float (any float dtype; accumulated in f32)
    targets: [B, H, W]    int class ids in [0, num_classes)
    returns: scalar float32 dice loss
    """
    B, C, H, W = logits.shape
    assert C == num_classes
    HW = H * W

    # Flatten spatial dims to a lane-dense last axis (contiguous merge -> free).
    probs = logits.reshape(B, C, HW)

    # Targets: fold ignore_index into a -1 sentinel (so the kernel mask is a
    # single compare) and shrink the stream to int8 when classes fit.
    tgt = targets.reshape(B, 1, HW).astype(jnp.int32)
    tgt = jnp.where(tgt == ignore_index, -1, tgt)
    if num_classes <= 127:
        tgt_dtype, tgt_itemsize = jnp.int8, 1
    else:
        tgt_dtype, tgt_itemsize = jnp.int32, 4
    tgt = tgt.astype(tgt_dtype)

    # Accumulator folding: groups of 8 class rows (vreg-aligned for f32).
    if C > 8 and C % 8 == 0:
        n_groups, G = C // 8, 8
    else:
        n_groups, G = 1, C

    # ---- tile sizing from *padded* buffer shapes -----------------------------
    itemsize = probs.dtype.itemsize
    sub_map = {4: 8, 2: 16, 1: 32}
    padded_c = -(-C // sub_map.get(itemsize, 8)) * sub_map.get(itemsize, 8)
    tgt_sub = sub_map.get(tgt_itemsize, 8)
    padded_g = -(-G // 8) * 8

    try:
        vmem_cap = int(getattr(pltpu.get_tpu_info(), "vmem_capacity_bytes", 64 << 20))
    except Exception:
        vmem_cap = 64 << 20                       # conservative (v7x per-TC)
    if vmem_cap >= 100 * 1024 * 1024:             # v5e / v6e: 128 MiB VMEM
        target_block, vmem_budget, vmem_limit = 4 << 20, 48 << 20, 64 << 20
    else:                                         # v7x: 64 MiB per TensorCore
        target_block, vmem_budget, vmem_limit = 2 << 20, 36 << 20, 48 << 20

    per_lane_bytes = (2 * padded_c * itemsize      # double-buffered probs block
                      + 2 * tgt_sub * tgt_itemsize  # double-buffered targets block
                      + padded_g * 4)               # accumulator scratch
    tile = (target_block // (padded_c * itemsize) // 128) * 128
    tile = min(tile, (vmem_budget // per_lane_bytes // 128) * 128)
    tile = int(max(tile, 128))

    if HW <= tile:
        TILE, n_tiles = HW, 1
    else:
        TILE, n_tiles = tile, -(-HW // tile)

    # Spatial split for megacore balance when the batch axis alone cannot
    # (B == 1 or odd B on v7x); harmless on single-TC generations.
    n_outer = 2 if (B % 2 == 1 and n_tiles >= 2 and n_tiles % 2 == 0) else 1
    n_inner = n_tiles // n_outer

    # Pad ONLY the tiny targets with -1 so the ragged last probs block's
    # out-of-bounds lanes never match any class row.
    hw_pad = n_tiles * TILE - HW
    if hw_pad:
        tgt = jnp.pad(tgt, ((0, 0), (0, 0), (0, hw_pad)), constant_values=-1)

    kernel = functools.partial(_dice_partial_kernel, n_groups=n_groups)

    cost = pl.CostEstimate(
        flops=int(3 * B * C * n_tiles * TILE),
        transcendentals=0,
        bytes_accessed=int(probs.size * itemsize + tgt.size * tgt_itemsize
                           + B * n_outer * 4),
    )

    inter_part = pl.pallas_call(
        kernel,
        out_shape=jax.ShapeDtypeStruct((B, n_outer, 1, 1), jnp.float32),
        grid_spec=pltpu.PrefetchScalarGridSpec(
            num_scalar_prefetch=0,
            grid=(B, n_outer, n_inner),
            in_specs=[
                pl.BlockSpec((1, C, TILE), lambda b, o, j: (b, 0, o * n_inner + j)),
                pl.BlockSpec((1, 1, TILE), lambda b, o, j: (b, 0, o * n_inner + j)),
            ],
            out_specs=pl.BlockSpec((1, 1, 1, 1), lambda b, o, j: (b, o, 0, 0)),
            scratch_shapes=[pltpu.VMEM((G, TILE), jnp.float32)],
        ),
        compiler_params=pltpu.CompilerParams(
            dimension_semantics=("parallel", "parallel", "arbitrary"),
            vmem_limit_bytes=vmem_limit,
        ),
        cost_estimate=cost,
    )(probs, tgt)

    # Scalar epilogue in JAX: combine partials, free valid-pixel count, dice.
    inter = jnp.sum(inter_part)
    n = jnp.sum(targets != ignore_index).astype(jnp.float32)
    dice = 2.0 * inter / (inter + n + smooth)
    return -jnp.log(dice)


def multiclass_dice_loss_ref(logits, targets, num_classes, smooth=1e-06, ignore_index=0):
    """Pure-JAX reference matching the PyTorch module exactly."""
    one_hot = jax.nn.one_hot(targets, num_classes, dtype=logits.dtype)  # [B,H,W,C]
    one_hot = jnp.transpose(one_hot, (0, 3, 1, 2))                      # [B,C,H,W]
    inter = (one_hot[:, :ignore_index] * logits[:, :ignore_index]).sum() + \
            (one_hot[:, ignore_index + 1:] * logits[:, ignore_index + 1:]).sum()
    n = (targets != ignore_index).sum()
    dice = 2.0 * inter / (inter + n + smooth)
    return -jnp.log(dice)


if __name__ == "__main__":
    B, C, H, W = 2, 4, 16, 16
    key = jax.random.PRNGKey(0)
    k_logits, k_tgt = jax.random.split(key)

    # The module uses logits directly as "probabilities"; use positive values
    # so the log is well-defined (matches typical post-softmax inputs).
    logits = jax.random.uniform(k_logits, (B, C, H, W), dtype=jnp.float32)
    targets = jax.random.randint(k_tgt, (B, H, W), 0, C, dtype=jnp.int32)

    loss = jax.block_until_ready(multiclass_dice_loss(logits, targets, num_classes=C))
    ref = jax.block_until_ready(multiclass_dice_loss_ref(logits, targets, num_classes=C))
    # NOTE: for bf16 inputs the kernel (f32 accumulation) is more accurate than
    # the reference (sums in input dtype); loosen tolerances in that case.
    np.testing.assert_allclose(np.asarray(loss), np.asarray(ref), rtol=1e-5, atol=1e-6)

    print("KERNEL_OK")
</pallas_src>

<mosaic_0001>
module attributes {stable_mosaic.version = 11 : i64} {
  func.func @_dice_partial_kernel(%arg0: i32, %arg1: i32, %arg2: i32, %arg3: memref<1x4x256xf32, #tpu.memory_space<vmem>>, %arg4: memref<1x1x256xi8, #tpu.memory_space<vmem>>, %arg5: memref<1x1x1x1xf32, #tpu.memory_space<vmem>>, %arg6: memref<4x256xf32, #tpu.memory_space<vmem>>) attributes {dimension_semantics = [#tpu.dimension_semantics<parallel>, #tpu.dimension_semantics<parallel>, #tpu.dimension_semantics<arbitrary>], iteration_bounds = array<i64: 2, 1, 1>, scalar_prefetch = 0 : i64, scratch_operands = 1 : i64, tpu.core_type = #tpu.core_type<tc>, window_params = [{transform_indices = @transform_0, window_bounds = array<i64: 1, 4, 256>}, {transform_indices = @transform_1, window_bounds = array<i64: 1, 1, 256>}, {transform_indices = @transform_2, window_bounds = array<i64: 1, 1, 1, 1>}]} {
    %c0_i32 = arith.constant 0 : i32
    %0 = arith.cmpi eq, %arg2, %c0_i32 : i32
    %1 = arith.extui %0 : i1 to i32
    %c0_i32_0 = arith.constant 0 : i32
    %2 = arith.cmpi ne, %1, %c0_i32_0 : i32
    scf.if %2 {
      %cst_12 = arith.constant 0.000000e+00 : f32
      %19 = vector.broadcast %cst_12 : f32 to vector<4x256xf32>
      %c0_13 = arith.constant 0 : index
      %c0_14 = arith.constant 0 : index
      %20 = vector.load %arg6[%c0_13, %c0_14] : memref<4x256xf32, #tpu.memory_space<vmem>>, vector<4x256xf32>
      tpu.vector_store %arg6[%c0_13, %c0_14], %19 {strides = array<i32>} : memref<4x256xf32, #tpu.memory_space<vmem>>, vector<4x256xf32>,
    } else {
    }
    %c0 = arith.constant 0 : index
    %c0_1 = arith.constant 0 : index
    %c0_2 = arith.constant 0 : index
    %3 = vector.load %arg3[%c0, %c0_1, %c0_2] : memref<1x4x256xf32, #tpu.memory_space<vmem>>, vector<1x4x256xf32>
    %4 = vector.shape_cast %3 : vector<1x4x256xf32> to vector<4x256xf32>
    %c0_3 = arith.constant 0 : index
    %c0_4 = arith.constant 0 : index
    %c0_5 = arith.constant 0 : index
    %5 = vector.load %arg4[%c0_3, %c0_4, %c0_5] : memref<1x1x256xi8, #tpu.memory_space<vmem>>, vector<1x1x256xi8>
    %6 = vector.shape_cast %5 : vector<1x1x256xi8> to vector<1x256xi8>
    %7 = arith.extsi %6 : vector<1x256xi8> to vector<1x256xi32>
    %8 = tpu.iota {dimensions = array<i32: 0>} : vector<4x256xi32>
    %9 = vector.broadcast %7 : vector<1x256xi32> to vector<4x256xi32>
    %10 = arith.cmpi eq, %9, %8 : vector<4x256xi32>
    %cst = arith.constant 0.000000e+00 : f32
    %11 = vector.broadcast %cst : f32 to vector<4x256xf32>
    %12 = arith.select %10, %4, %11 : vector<4x256xi1>, vector<4x256xf32>
    %c0_6 = arith.constant 0 : index
    %c0_7 = arith.constant 0 : index
    %13 = vector.load %arg6[%c0_6, %c0_7] : memref<4x256xf32, #tpu.memory_space<vmem>>, vector<4x256xf32>
    %14 = arith.addf %13, %12 : vector<4x256xf32>
    %c0_8 = arith.constant 0 : index
    %c0_9 = arith.constant 0 : index
    %15 = vector.load %arg6[%c0_8, %c0_9] : memref<4x256xf32, #tpu.memory_space<vmem>>, vector<4x256xf32>
    tpu.vector_store %arg6[%c0_8, %c0_9], %14 {strides = array<i32>} : memref<4x256xf32, #tpu.memory_space<vmem>>, vector<4x256xf32>,
    %c0_i32_10 = arith.constant 0 : i32
    %16 = arith.cmpi eq, %arg2, %c0_i32_10 : i32
    %17 = arith.extui %16 : i1 to i32
    %c0_i32_11 = arith.constant 0 : i32
    %18 = arith.cmpi ne, %17, %c0_i32_11 : i32
    scf.if %18 {
      %c0_12 = arith.constant 0 : index
      %c0_13 = arith.constant 0 : index
      %19 = vector.load %arg6[%c0_12, %c0_13] : memref<4x256xf32, #tpu.memory_space<vmem>>, vector<4x256xf32>
      %20 = vector.shape_cast %19 : vector<4x256xf32> to vector<1x4x256xf32>
      %cst_14 = arith.constant dense<0.000000e+00> : vector<1xf32>
      %21 = vector.multi_reduction <add>, %20, %cst_14 [1, 2] : vector<1x4x256xf32> to vector<1xf32>
      %22 = vector.shape_cast %21 : vector<1xf32> to vector<1x1x1xf32>
      %23 = vector.extract %22[0, 0, 0] : f32 from vector<1x1x1xf32>
      %24 = vector.broadcast %23 : f32 to vector<1x1xf32>
      %c0_15 = arith.constant 0 : index
      %c0_16 = arith.constant 0 : index
      %c0_17 = arith.constant 0 : index
      %c0_18 = arith.constant 0 : index
      %25 = vector.load %arg5[%c0_15, %c0_16, %c0_17, %c0_18] : memref<1x1x1x1xf32, #tpu.memory_space<vmem>>, vector<1x1x1x1xf32>
      %26 = vector.shape_cast %25 : vector<1x1x1x1xf32> to vector<1x1xf32>
      %27 = vector.shape_cast %24 : vector<1x1xf32> to vector<1x1x1x1xf32>
      tpu.vector_store %arg5[%c0_15, %c0_16, %c0_17, %c0_18], %27 {strides = array<i32>} : memref<1x1x1x1xf32, #tpu.memory_space<vmem>>, vector<1x1x1x1xf32>,
    } else {
    }
    return
  }
  func.func @transform_0(%arg0: i32, %arg1: i32, %arg2: i32) -> (i32, i32, i32) {
    %c1_i32 = arith.constant 1 : i32
    %0 = arith.muli %arg1, %c1_i32 : i32
    %1 = arith.addi %0, %arg2 : i32
    %c0_i32 = arith.constant 0 : i32
    %c0_i32_0 = arith.constant 0 : i32
    return %arg0, %c0_i32, %1 : i32, i32, i32
  }
  func.func @transform_1(%arg0: i32, %arg1: i32, %arg2: i32) -> (i32, i32, i32) {
    %c1_i32 = arith.constant 1 : i32
    %0 = arith.muli %arg1, %c1_i32 : i32
    %1 = arith.addi %0, %arg2 : i32
    %c0_i32 = arith.constant 0 : i32
    %c0_i32_0 = arith.constant 0 : i32
    return %arg0, %c0_i32, %1 : i32, i32, i32
  }
  func.func @transform_2(%arg0: i32, %arg1: i32, %arg2: i32) -> (i32, i32, i32, i32) {
    %c0_i32 = arith.constant 0 : i32
    %c0_i32_0 = arith.constant 0 : i32
    %c0_i32_1 = arith.constant 0 : i32
    return %arg0, %arg1, %c0_i32, %c0_i32_0 : i32, i32, i32, i32
  }
}

</mosaic_0001>

<llo_original>
// kernel: tpu_custom_call.1
$region0: #{tpu_custom_call.1}
  #allocation0 [shape = 'u32[]', space=smem, size = 0x4, offset = 0x4, fixed_abs, tag = 'smem constant byte address 0x4 - core index']
  #allocation1 [shape = 'u32[144,128]{1,0:T(1,128)}', space=vmem, size = 0x12000, scoped, tag = 'internal scratch']
  #allocation2 [shape = 'f32[4,256]{1,0:T(4,128)}', space=vmem, size = 0x1000, scoped, tag = 'scratch operand']
  %s0 = inlined_call_operand.hbm [shape: f32[2,4,256], index: 0, kind: input, shape index: {}]
  %s1 = inlined_call_operand.vmem [shape: s8[2,1,256], index: 1, kind: input, shape index: {}]
  %s2 = inlined_call_operand.vmem [shape: f32[2,1,1,1], index: 2, kind: output, shape index: {}]
  %s3 = sld [smem:[#allocation0]]
  $region53: #{tpu_custom_call.1} parent=0
    _
  %s5 = ssub.s32 1, %s3
  %s6 = scalar_select 0, %s5, %s3
  $region1: #{tpu_custom_call.1} parent=0
    #allocation3 [shape = 'u8[8192]{0}', space=vmem, size = 0x2000, scoped, tag = 'input window, operand 0']
    #allocation4 [shape = 's32[2]{0}', space=sflag, size = 0x8, scoped, tag = 'scoped memory for tpu_custom_call.1']
    %7 = vsyncpa [#allocation4], 0
    %s8 = scalar_lea.sflag [#allocation4], 1
    %9 = vsyncpa %s8, 0
    loop: start=0, step=1, limit=4
    $region2: #{tpu_custom_call.1} parent=1 // loop_pre_header
      _
    $region3: #{tpu_custom_call.1} parent=1 // loop_header
      %s11 = sphi 0, %s15
      %p12 = scmp.ge.s32.totalorder %s11, 4
      %s18 = sphi 0, %s37
      %s19 = sphi 0, %s33
      %s20 = sphi 0, %s29
      %s21 = sphi 0, %s18
      %s22 = sphi 0, %s19
      %s23 = sphi 0, %s20
      %s24 = sphi 0, %s21
      %s25 = sphi 0, %s22
      %s26 = sphi 0, %s23
      %s44 = sphi 0, %s46
      %s47 = sphi 0, %s44
      %s48 = sphi 0, %s47
      %s64 = sphi 0, %s48
      %s74 = sphi 0, %s76
      %s77 = sphi 0, %s74
      %s78 = sphi 0, %s77
      %s94 = sphi 0, %s78
      %s102 = sphi 0, %s104
      %s105 = sphi 0, %s102
      %s106 = sphi 0, %s105
      %s122 = sphi 0, %s106
    $region4: #{tpu_custom_call.1} parent=1 // loop_header_branch
      %14 = sbr.rel (%p12) target = $region8
    $region5: #{tpu_custom_call.1} parent=1 // loop_body
      %s16 = ssub.s32 %s11, 1
      %s17 = ssub.s32 %s11, 2
      %s27 = sadd.s32 1, %s20
      %p28 = scmp.ge.s32.totalorder %s27, 1
      %s29 = scalar_select %p28, 0, %s27
      %s30 = sadd.s32 1, %s19
      %s31 = scalar_select %p28, %s30, %s19
      %p32 = scmp.ge.s32.totalorder %s31, 1
      %s33 = scalar_select %p32, 0, %s31
      %s34 = sadd.s32 1, %s18
      %s35 = scalar_select %p32, %s34, %s18
      %p36 = scmp.ge.s32.totalorder %s35, 2
      %s37 = scalar_select %p36, 0, %s35
      %s38 = sadd.s32 %s19, %s20
      %s39 = sadd.s32 %s33, %s29
      %s40 = ssub.s32 %s18, %s37
      %s41 = ssub.s32 %s38, %s39
      %s42 = sor.u32 %s40, %s41
      %p43 = scmp.eq.s32.totalorder %s42, 0
      %s45 = sadd.s32 %s44, 1
      %s46 = scalar_select %p43, %s44, %s45
      %p49 = pneg %p43
      %p50 = scmp.eq.s32.totalorder %s11, 1
      %p51 = por %p49, %p50
      %p52 = scmp.ne.s32.totalorder %s44, %s47
      %p53 = scmp.eq.s32.totalorder %s11, 0
      %p54 = por %p52, %p53
      %p55 = scmp.ne.s32.totalorder %s44, %s47
      %p56 = scmp.eq.s32.totalorder %s16, 1
      %p57 = por %p55, %p56
      %p58 = scmp.ne.s32.totalorder %s47, %s48
      %p59 = scmp.eq.s32.totalorder %s16, 0
      %p60 = por %p58, %p59
      %p61 = scmp.ne.s32.totalorder %s47, %s48
      %p62 = scmp.eq.s32.totalorder %s17, 1
      %p63 = por %p61, %p62
      %p65 = scmp.ne.s32.totalorder %s48, %s64
      %p66 = scmp.eq.s32.totalorder %s17, 0
      %p67 = por %p65, %p66
      %s68 = sadd.s32 %s19, %s20
      %s69 = sadd.s32 %s33, %s29
      %s70 = ssub.s32 %s18, %s37
      %s71 = ssub.s32 %s68, %s69
      %s72 = sor.u32 %s70, %s71
      %p73 = scmp.eq.s32.totalorder %s72, 0
      %s75 = sadd.s32 %s74, 1
      %s76 = scalar_select %p73, %s74, %s75
      %p79 = pneg %p73
      %p80 = scmp.eq.s32.totalorder %s11, 1
      %p81 = por %p79, %p80
      %p82 = scmp.ne.s32.totalorder %s74, %s77
      %p83 = scmp.eq.s32.totalorder %s11, 0
      %p84 = por %p82, %p83
      %p85 = scmp.ne.s32.totalorder %s74, %s77
      %p86 = scmp.eq.s32.totalorder %s16, 1
      %p87 = por %p85, %p86
      %p88 = scmp.ne.s32.totalorder %s77, %s78
      %p89 = scmp.eq.s32.totalorder %s16, 0
      %p90 = por %p88, %p89
      %p91 = scmp.ne.s32.totalorder %s77, %s78
      %p92 = scmp.eq.s32.totalorder %s17, 1
      %p93 = por %p91, %p92
      %p95 = scmp.ne.s32.totalorder %s78, %s94
      %p96 = scmp.eq.s32.totalorder %s17, 0
      %p97 = por %p95, %p96
      %s98 = ssub.s32 %s18, %s37
      %s99 = ssub.s32 %s19, %s33
      %s100 = sor.u32 %s98, %s99
      %p101 = scmp.eq.s32.totalorder %s100, 0
      %s103 = sadd.s32 %s102, 1
      %s104 = scalar_select %p101, %s102, %s103
      %p107 = pneg %p101
      %p108 = scmp.eq.s32.totalorder %s11, 1
      %p109 = por %p107, %p108
      %p110 = scmp.ne.s32.totalorder %s102, %s105
      %p111 = scmp.eq.s32.totalorder %s11, 0
      %p112 = por %p110, %p111
      %p113 = scmp.ne.s32.totalorder %s102, %s105
      %p114 = scmp.eq.s32.totalorder %s16, 1
      %p115 = por %p113, %p114
      %p116 = scmp.ne.s32.totalorder %s105, %s106
      %p117 = scmp.eq.s32.totalorder %s16, 0
      %p118 = por %p116, %p117
      %p119 = scmp.ne.s32.totalorder %s105, %s106
      %p120 = scmp.eq.s32.totalorder %s17, 1
      %p121 = por %p119, %p120
      %p123 = scmp.ne.s32.totalorder %s106, %s122
      %p124 = scmp.eq.s32.totalorder %s17, 0
      %p125 = por %p123, %p124
      %p126 = scmp.le.s32.totalorder 1, %s11
      %p127 = scmp.lt.s32.totalorder %s11, 3
      %p128 = pnand %p126, %p127
      %p129 = pneg %p128
      // Predicated region
      $region9: #{tpu_custom_call.1} parent=5 // pred_check
        _
      $region10: #{tpu_custom_call.1} parent=5 // pred_check_branch
        %131 = sbr.rel (%p128) target = $region12
      $region11: #{tpu_custom_call.1} parent=5 // pred_region
        %s132 = ssub.s32 %s11, 1
      $region12: #{tpu_custom_call.1} parent=5 // pred_fallthru
        _
      %p133 = scmp.lt.s32.totalorder %s11, 2
      // Predicated region
      $region13: #{tpu_custom_call.1} parent=5 // pred_check
        %p134 = pneg %p133
      $region14: #{tpu_custom_call.1} parent=5 // pred_check_branch
        %136 = sbr.rel (%p134) target = $region16
      $region15: #{tpu_custom_call.1} parent=5 // pred_region
        // Predicated region
        $region17: #{tpu_custom_call.1} parent=15 // pred_check
          %p137 = pneg %p54
        $region18: #{tpu_custom_call.1} parent=15 // pred_check_branch
          %139 = sbr.rel (%p137) target = $region20
        $region19: #{tpu_custom_call.1} parent=15 // pred_region
          %s140 = sand.u32 %s44, 1
          %s141 = scalar_lea.sflag [#allocation4], %s140
          %s142 = sand.u32 %s44, 1
          %s143 = smul.addr %s142, 8
          %s144 = scalar_lea.vmem [#allocation3], %s143
          %s145 = sadd.s32 %s19, %s20
          %s146 = smul.u32 2, %s145
          %s148 = ssub.s32 128, 128
          %149 = vsyncadd %s141, %s148
          %s150 = smul.addr %s18, 2
          %s151 = sadd.s32 %s146, %s150
          %s152 = smul.addr %s151, 64
          %s153 = scalar_lea.hbm %s0, %s152
          %s155 = sshll.u32 %s144, 4
          %s156 = int_to_ptr.vmem [resolvable:$true] %s155
          %158 = dma.hbm_to_vmem [thread:$0]  %s153, 128, %s156, %s141
        $region20: #{tpu_custom_call.1} parent=15 // pred_fallthru
          _
        // Predicated region
        $region21: #{tpu_custom_call.1} parent=15 // pred_check
          %p159 = pneg %p84
        $region22: #{tpu_custom_call.1} parent=15 // pred_check_branch
          %161 = sbr.rel (%p159) target = $region24
        $region23: #{tpu_custom_call.1} parent=15 // pred_region
          %s162 = sadd.s32 %s19, %s20
          %s163 = smul.u32 2, %s162
          %p164 = scmp.lt.s32.totalorder %s18, 1
          %s165 = scalar_select %p164, %s18, 1
          %p166 = scmp.lt.s32.totalorder %s163, 1
          %s167 = scalar_select %p166, %s163, 1
          %s168 = smul.addr %s165, 2
          %s169 = sadd.s32 %s167, %s168
          %s170 = scalar_lea.vmem %s1, %s169
          %s171 = sadd.s32 %s19, %s20
          %s172 = smul.u32 2, %s171
        $region24: #{tpu_custom_call.1} parent=15 // pred_fallthru
          _
      $region16: #{tpu_custom_call.1} parent=5 // pred_fallthru
        _
      %p173 = scmp.le.s32.totalorder 1, %s11
      %p174 = scmp.lt.s32.totalorder %s11, 3
      %p175 = pnand %p173, %p174
      %p176 = pneg %p175
      // Predicated region
      $region25: #{tpu_custom_call.1} parent=5 // pred_check
        _
      $region26: #{tpu_custom_call.1} parent=5 // pred_check_branch
        %178 = sbr.rel (%p175) target = $region28
      $region27: #{tpu_custom_call.1} parent=5 // pred_region
        %s179 = ssub.s32 %s11, 1
        %s180 = sand.u32 %s47, 1
        %s181 = scalar_lea.sflag [#allocation4], %s180
        %s182 = sand.u32 %s47, 1
        %s183 = smul.addr %s182, 8
        %s184 = scalar_lea.vmem [#allocation3], %s183
        // Predicated region
        $region29: #{tpu_custom_call.1} parent=27 // pred_check
          %p185 = pneg %p60
        $region30: #{tpu_custom_call.1} parent=27 // pred_check_branch
          %187 = sbr.rel (%p185) target = $region32
        $region31: #{tpu_custom_call.1} parent=27 // pred_region
          %188 = dma.done %s181, 128
        $region32: #{tpu_custom_call.1} parent=27 // pred_fallthru
          _
        %s189 = sand.u32 %s47, 1
        %s190 = scalar_lea.sflag [#allocation4], %s189
        %s191 = sand.u32 %s47, 1
        %s192 = smul.addr %s191, 8
        %s193 = scalar_lea.vmem [#allocation3], %s192
        %p194 = pneg %p60
        %p195 = pneg %p57
        %s196 = sadd.s32 %s22, %s23
        %s197 = smul.u32 2, %s196
        %p198 = scmp.lt.s32.totalorder %s21, 1
        %s199 = scalar_select %p198, %s21, 1
        %p200 = scmp.lt.s32.totalorder %s197, 1
        %s201 = scalar_select %p200, %s197, 1
        %s202 = smul.addr %s199, 2
        %s203 = sadd.s32 %s201, %s202
        %s204 = scalar_lea.vmem %s1, %s203
        %p205 = pneg %p90
        %p206 = pneg %p87
        %p207 = pneg %p118
        %p208 = pneg %p115
        %p209 = scmp.lt.s32.totalorder %s21, 1
        %s210 = scalar_select %p209, %s21, 1
        %p211 = scmp.lt.s32.totalorder %s22, 0
        %s212 = scalar_select %p211, %s22, 0
        %s213 = sadd.s32 %s212, %s210
        %s214 = scalar_lea.vmem %s2, %s213
        %s215 = sadd.s32 %s22, %s23
        %s216 = smul.u32 2, %s215
        %s217 = sadd.s32 %s22, %s23
        %s218 = smul.u32 2, %s217
        %p219 = scmp.lt.s32.totalorder %s21, 1
        %s220 = scalar_select %p219, %s21, 1
        %p221 = scmp.lt.s32.totalorder %s218, 1
        %s222 = scalar_select %p221, %s218, 1
        %s223 = smul.addr %s220, 2
        %s224 = sadd.s32 %s222, %s223
        %s225 = scalar_lea.vmem %s1, %s224
        %s226 = sadd.s32 %s22, %s23
        %s227 = smul.u32 2, %s226
        %p228 = scmp.lt.s32.totalorder %s21, 1
        %s229 = scalar_select %p228, %s21, 1
        %p230 = scmp.lt.s32.totalorder %s22, 0
        %s231 = scalar_select %p230, %s22, 0
        %s232 = sadd.s32 %s231, %s229
        %s233 = scalar_lea.vmem %s2, %s232
        %p234 = scmp.eq.s32.totalorder %s23, 0
        // Predicated region
        $region33: #{tpu_custom_call.1} parent=27 // pred_check
          %p235 = pneg %p234
        $region34: #{tpu_custom_call.1} parent=27 // pred_check_branch
          %237 = sbr.rel (%p235) target = $region36
        $region35: #{tpu_custom_call.1} parent=27 // pred_region
          %238 = vst [vmem:[#allocation2] sm:$0xff] 0.0
        $region36: #{tpu_custom_call.1} parent=27 // pred_fallthru
          _
        %v239 = vld [vmem:[%s184] sm:$0xff]
        %v240 = vld [vmem:[%s225] sm:$0x3]
        %v241 = vunpack.c.0.s8 %v240
        %v242 = vlaneseq
        %v243 = vshrl.u32 %v242, 7
        %v244 = vlaneseq
        %v245 = vshrl.u32 %v244, 7
        %v246 = vsub.s32 0, %v245
        %v247 = vrot.slane %v241, %v246
        %v248 = vlaneseq
        %v249 = vshrl.u32 %v248, 7
        %v250 = vsub.s32 4, %v249
        %v251 = vrot.slane %v241, %v250
        %v252 = vlaneseq
        %v253 = vshrl.u32 %v252, 7
        %v254 = vsub.s32 0, %v253
        %v255 = vrot.slane %v247, %v254
        %v256 = vlaneseq
        %v257 = vshrl.u32 %v256, 7
        %v258 = vsub.s32 0, %v257
        %v259 = vrot.slane %v251, %v258
        %vm260 = vcmp.eq.s32.totalorder %v255, %v243
        %vm261 = vcmp.eq.s32.totalorder %v259, %v243
        %v263 = vcombine.high %v239, %v239
        %v265 = vsel %vm260, %v239, 0.0
        %v266 = vsel %vm261, %v263, 0.0
        %v267 = vld [vmem:[#allocation2] sm:$0xff]
        %v270 = vcombine.low %v265, %v266
        %v272 = vadd.f32 %v267, %v270
        %273 = vst [vmem:[#allocation2] sm:$0xff] %v272
        // Predicated region
        $region37: #{tpu_custom_call.1} parent=27 // pred_check
          %p274 = pneg %p234
        $region38: #{tpu_custom_call.1} parent=27 // pred_check_branch
          %276 = sbr.rel (%p274) target = $region40
        $region39: #{tpu_custom_call.1} parent=27 // pred_region
          %v277 = vld [vmem:[#allocation2] sm:$0xff]
          %v279 = vcombine.high %v277, %v277
          %vm281 = vcmask 1043456
          %v282 = vsel %vm281, %v277, 0.0
          %v283 = vsel %vm281, %v279, 0.0
          %v284 = vadd.f32 %v282, %v283
          %285 = vadd.xlane.f32.xlu0 %v284
          %v286 = vpop.xlane.xlu0 %285
          %v287 = vrot.slane %v286, 4
          %v288 = vadd.f32 %v286, %v287
          %v289 = vrot.slane %v288, 2
          %v290 = vadd.f32 %v288, %v289
          %v291 = vrot.slane %v290, 1
          %v292 = vadd.f32 %v290, %v291
          %s293 = vtos %v292
          %v294 = vstv %s293
          %vm295 = vcmask 0
          %296 = vst.msk [vmem:[%s233] sm:$0x1] %vm295, %v294
        $region40: #{tpu_custom_call.1} parent=27 // pred_fallthru
          _
        %p297 = scmp.lt.s32.totalorder %s21, 1
        %s298 = scalar_select %p297, %s21, 1
        %p299 = scmp.lt.s32.totalorder %s22, 0
        %s300 = scalar_select %p299, %s22, 0
        %s301 = sadd.s32 %s300, %s298
        %s302 = scalar_lea.vmem %s2, %s301
        // Predicated region
        $region41: #{tpu_custom_call.1} parent=27 // pred_check
          %p303 = pneg %p115
        $region42: #{tpu_custom_call.1} parent=27 // pred_check_branch
          %305 = sbr.rel (%p303) target = $region44
        $region43: #{tpu_custom_call.1} parent=27 // pred_region
          _
        $region44: #{tpu_custom_call.1} parent=27 // pred_fallthru
          _
      $region28: #{tpu_custom_call.1} parent=5 // pred_fallthru
        _
      %p306 = scmp.le.s32.totalorder 2, %s11
      // Predicated region
      $region45: #{tpu_custom_call.1} parent=5 // pred_check
        %p307 = pneg %p306
      $region46: #{tpu_custom_call.1} parent=5 // pred_check_branch
        %309 = sbr.rel (%p307) target = $region48
      $region47: #{tpu_custom_call.1} parent=5 // pred_region
        %s310 = ssub.s32 %s11, 2
        // Predicated region
        $region49: #{tpu_custom_call.1} parent=47 // pred_check
          %p311 = pneg %p121
        $region50: #{tpu_custom_call.1} parent=47 // pred_check_branch
          %313 = sbr.rel (%p311) target = $region52
        $region51: #{tpu_custom_call.1} parent=47 // pred_region
          %p314 = scmp.lt.s32.totalorder %s24, 1
          %s315 = scalar_select %p314, %s24, 1
          %p316 = scmp.lt.s32.totalorder %s25, 0
          %s317 = scalar_select %p316, %s25, 0
          %s318 = sadd.s32 %s317, %s315
          %s319 = scalar_lea.vmem %s2, %s318
        $region52: #{tpu_custom_call.1} parent=47 // pred_fallthru
          _
      $region48: #{tpu_custom_call.1} parent=5 // pred_fallthru
        _
    $region6: #{tpu_custom_call.1} parent=1 // loop_footer
      %s15 = sadd.s32 1, %s11
    $region7: #{tpu_custom_call.1} parent=1 // loop_footer_branch
      %10 = sbr.rel target = $region3
    $region8: #{tpu_custom_call.1} parent=1 // loop_exit
      _
    %320 = vsyncpa [#allocation4], 1
    %s321 = scalar_lea.sflag [#allocation4], 1
    %322 = vsyncpa %s321, 1

</llo_original>
